<compile_context>
chip_gen: v5e
topology: v5e:2x2
jax: 0.10.0
libtpu: 0.0.40
codegen_flags: <defaults>
</compile_context>

<pallas_src>
import functools

import jax
import jax.numpy as jnp
from jax.experimental import pallas as pl
from jax.experimental.pallas import tpu as pltpu


def _round_up(n: int, m: int) -> int:
    return ((n + m - 1) // m) * m


def simple_rnn_kernel(x_ref, h_ref, w_ih_ref, w_hh_ref, w_fc_ref,
                      out_ref, h_new_ref, xpad_ref, *,
                      batch: int, input_size: int, hidden_size: int):
    """One fused RNNCell(tanh) step + Linear head, entirely in VMEM.

    x_ref     : (B,     I)      unpadded word vector (full-array block)
    h_ref     : (B_pad, H_pad)  padded hidden state carried across steps
    w_ih_ref  : (I_pad, H_pad)  rows [:I] = W_ih^T, row I = b_ih + b_hh
    w_hh_ref  : (H_pad, H_pad)  rows [:H] = W_hh^T, zero elsewhere
    w_fc_ref  : (H_pad, O_pad)  rows [:H] = W_fc^T, row H = b_fc
    out_ref   : (B_pad, O_pad)  fc output (lane-dense store)
    h_new_ref : (B_pad, H_pad)  new padded hidden state (lane-dense store)
    xpad_ref  : (B_pad, I_pad)  VMEM scratch: padded x with a constant-1 lane
    """
    B, I, H = batch, input_size, hidden_size
    f32 = jnp.float32

    # ---- In-kernel padded-x assembly (replaces the wrapper XLA fusion). ----
    # Background is zeros except a constant-1 column at lane I, which drives
    # the folded (b_ih + b_hh) row of w_ih.
    lane_x = jax.lax.broadcasted_iota(jnp.int32, xpad_ref.shape, 1)
    xpad_ref[...] = jnp.where(lane_x == I, f32(1), f32(0)).astype(xpad_ref.dtype)
    xpad_ref[:B, :I] = x_ref[...]

    # ---- Recurrence: two aligned MXU dots, f32 accumulation, tanh on EUP. --
    pre = jnp.dot(xpad_ref[...], w_ih_ref[...], preferred_element_type=f32)
    pre = pre + jnp.dot(h_ref[...], w_hh_ref[...], preferred_element_type=f32)
    h_act = jnp.tanh(pre)            # padded lanes stay tanh(0) = 0

    # ---- FC head with folded bias: a constant-1 lane at column H drives the
    #      b_fc row of w_fc.  The stored hidden state keeps zero padded lanes.
    lane_h = jax.lax.broadcasted_iota(jnp.int32, h_act.shape, 1)
    h_fc = jnp.where(lane_h == H, f32(1), h_act)
    out = jnp.dot(h_fc, w_fc_ref[...], preferred_element_type=f32)

    h_new_ref[...] = h_act.astype(h_new_ref.dtype)
    out_ref[...] = out.astype(out_ref.dtype)


def prepare_params(params, dtype=jnp.float32):
    """One-time layout prep: transpose, fold biases into weight rows, zero-pad.

    Runs once (persistently), NOT per forward call.  dtype is pinned to f32 so
    the matmul/tanh path keeps the 1e-5 tolerance (and v5e has no bf16 VPU).
    """
    assert dtype == jnp.float32, "activation path is pinned to f32 (1e-5 tol)"
    w_ih, w_hh = params["w_ih"], params["w_hh"]     # (H, I), (H, H)
    b_ih, b_hh = params["b_ih"], params["b_hh"]     # (H,),   (H,)
    w_fc, b_fc = params["w_fc"], params["b_fc"]     # (O, H), (O,)

    H, I = w_ih.shape
    O = w_fc.shape[0]
    # +1 reserves a lane for the constant-1 slot that drives each folded bias.
    I_pad = _round_up(I + 1, 128)
    H_pad = _round_up(H + 1, 128)
    O_pad = _round_up(O, 128)

    w_ih_p = (jnp.zeros((I_pad, H_pad), dtype)
              .at[:I, :H].set(w_ih.T.astype(dtype))
              .at[I, :H].set((b_ih + b_hh).astype(dtype)))   # folded rec. bias
    w_hh_p = jnp.zeros((H_pad, H_pad), dtype).at[:H, :H].set(w_hh.T.astype(dtype))
    w_fc_p = (jnp.zeros((H_pad, O_pad), dtype)
              .at[:H, :O].set(w_fc.T.astype(dtype))
              .at[H, :O].set(b_fc.astype(dtype)))             # folded fc bias

    return {"w_ih": w_ih_p, "w_hh": w_hh_p, "w_fc": w_fc_p,
            "dims": (I, H, O, I_pad, H_pad, O_pad)}


def init_hidden(batch, prepared, dtype=jnp.float32):
    """Zero hidden state in the padded (B_pad, H_pad) carried form."""
    _, _, _, _, H_pad, _ = prepared["dims"]
    B_pad = _round_up(max(batch, 8), 8)
    return jnp.zeros((B_pad, H_pad), dtype)


def make_forward(prepared, *, batch, dtype=jnp.float32):
    """Builds the single-launch forward: (x, h_padded) -> (output, h_padded)."""
    I, H, O, I_pad, H_pad, O_pad = prepared["dims"]
    B_pad = _round_up(max(batch, 8), 8)

    kernel = functools.partial(simple_rnn_kernel, batch=batch,
                               input_size=I, hidden_size=H)
    vmem = pl.BlockSpec(memory_space=pltpu.MemorySpace.VMEM)

    call = pl.pallas_call(
        kernel,
        out_shape=(jax.ShapeDtypeStruct((B_pad, O_pad), dtype),
                   jax.ShapeDtypeStruct((B_pad, H_pad), dtype)),
        in_specs=[vmem] * 5,
        out_specs=(vmem, vmem),
        scratch_shapes=[pltpu.VMEM((B_pad, I_pad), dtype)],
        # Grid-less single-step call (~140 KiB total VMEM, far under the 64 MiB
        # v7x limit).  At larger H/O: tile w_hh / w_fc over a grid and mark a
        # batch axis "parallel" for v7x's two TensorCores.
    )

    w_ih_p, w_hh_p, w_fc_p = prepared["w_ih"], prepared["w_hh"], prepared["w_fc"]

    @jax.jit
    def forward(word_vector, hidden_padded):
        out_p, h_new_p = call(word_vector, hidden_padded, w_ih_p, w_hh_p, w_fc_p)
        # Only the user-facing output is sliced; h stays padded across steps.
        return out_p[:batch, :O], h_new_p

    return forward


def init_params(key, input_size, hidden_size, output_size, dtype=jnp.float32):
    """Deterministic synthetic parameters matching the PyTorch module shapes."""
    ks = jax.random.split(key, 6)
    scale = 0.1
    return {
        "w_ih": scale * jax.random.normal(ks[0], (hidden_size, input_size), dtype),
        "w_hh": scale * jax.random.normal(ks[1], (hidden_size, hidden_size), dtype),
        "b_ih": scale * jax.random.normal(ks[2], (hidden_size,), dtype),
        "b_hh": scale * jax.random.normal(ks[3], (hidden_size,), dtype),
        "w_fc": scale * jax.random.normal(ks[4], (output_size, hidden_size), dtype),
        "b_fc": scale * jax.random.normal(ks[5], (output_size,), dtype),
    }


def reference_forward(word_vector, hidden_state, p):
    """Pure-JAX reference mirroring nn.RNNCell(tanh) + nn.Linear."""
    h_new = jnp.tanh(
        word_vector @ p["w_ih"].T + p["b_ih"]
        + hidden_state @ p["w_hh"].T + p["b_hh"]
    )
    out = h_new @ p["w_fc"].T + p["b_fc"]
    return out, h_new


if __name__ == "__main__":
    batch = 2
    input_size = 8
    hidden_size = 4      # matches the PyTorch spec
    output_size = 3

    key = jax.random.PRNGKey(0)
    k_x1, k_x2, k_p = jax.random.split(key, 3)

    x_t1 = jax.random.normal(k_x1, (batch, input_size), jnp.float32)
    x_t2 = jax.random.normal(k_x2, (batch, input_size), jnp.float32)
    params = init_params(k_p, input_size, hidden_size, output_size)

    # One-time persistent weight prep — outside the per-step path.
    prepared = prepare_params(params)
    prepared = {k: (jax.block_until_ready(v) if isinstance(v, jax.Array) else v)
                for k, v in prepared.items()}

    forward = make_forward(prepared, batch=batch)
    h_pad = init_hidden(batch, prepared)

    # Two recurrent steps: the padded hidden state flows directly between
    # Pallas launches with no XLA re-pad / slice in between.
    out1, h_pad = forward(x_t1, h_pad)
    out2, h_pad = forward(x_t2, h_pad)
    out1 = jax.block_until_ready(out1)
    out2 = jax.block_until_ready(out2)
    h_pad = jax.block_until_ready(h_pad)

    # Pure-JAX reference for the same two steps.
    h_ref = jnp.zeros((batch, hidden_size), jnp.float32)
    ref_out1, h_ref = reference_forward(x_t1, h_ref, params)
    ref_out2, h_ref = reference_forward(x_t2, h_ref, params)

    assert jnp.allclose(out1, ref_out1, atol=1e-5, rtol=1e-5)
    assert jnp.allclose(out2, ref_out2, atol=1e-5, rtol=1e-5)
    assert jnp.allclose(h_pad[:batch, :hidden_size], h_ref, atol=1e-5, rtol=1e-5)
    # Padded lanes of the carried hidden state stay exactly zero.
    assert bool(jnp.all(h_pad[:batch, hidden_size:] == 0.0))

    print("KERNEL_OK")
</pallas_src>

<mosaic_0001>
module attributes {stable_mosaic.version = 11 : i64} {
  func.func @simple_rnn_kernel(%arg0: memref<2x8xf32, #tpu.memory_space<vmem>>, %arg1: memref<8x128xf32, #tpu.memory_space<vmem>>, %arg2: memref<128x128xf32, #tpu.memory_space<vmem>>, %arg3: memref<128x128xf32, #tpu.memory_space<vmem>>, %arg4: memref<128x128xf32, #tpu.memory_space<vmem>>, %arg5: memref<8x128xf32, #tpu.memory_space<vmem>>, %arg6: memref<8x128xf32, #tpu.memory_space<vmem>>, %arg7: memref<8x128xf32, #tpu.memory_space<vmem>>) attributes {dimension_semantics = [], scalar_prefetch = 0 : i64, scratch_operands = 1 : i64, tpu.core_type = #tpu.core_type<tc>} {
    %0 = tpu.iota {dimensions = array<i32: 1>} : vector<8x128xi32>
    %c8_i32 = arith.constant 8 : i32
    %1 = vector.broadcast %c8_i32 : i32 to vector<8x128xi32>
    %2 = arith.cmpi eq, %0, %1 : vector<8x128xi32>
    %cst = arith.constant 1.000000e+00 : f32
    %cst_0 = arith.constant 0.000000e+00 : f32
    %3 = vector.broadcast %cst : f32 to vector<8x128xf32>
    %4 = vector.broadcast %cst_0 : f32 to vector<8x128xf32>
    %5 = arith.select %2, %3, %4 : vector<8x128xi1>, vector<8x128xf32>
    %c0 = arith.constant 0 : index
    %c0_1 = arith.constant 0 : index
    %6 = vector.load %arg7[%c0, %c0_1] : memref<8x128xf32, #tpu.memory_space<vmem>>, vector<8x128xf32>
    tpu.vector_store %arg7[%c0, %c0_1], %5 {strides = array<i32>} : memref<8x128xf32, #tpu.memory_space<vmem>>, vector<8x128xf32>,
    %c0_2 = arith.constant 0 : index
    %c0_3 = arith.constant 0 : index
    %7 = vector.load %arg0[%c0_2, %c0_3] : memref<2x8xf32, #tpu.memory_space<vmem>>, vector<2x8xf32>
    %c0_4 = arith.constant 0 : index
    %c0_5 = arith.constant 0 : index
    %8 = vector.load %arg7[%c0_4, %c0_5] : memref<8x128xf32, #tpu.memory_space<vmem>>, vector<2x8xf32>
    tpu.vector_store %arg7[%c0_4, %c0_5], %7 {strides = array<i32>} : memref<8x128xf32, #tpu.memory_space<vmem>>, vector<2x8xf32>,
    %c0_6 = arith.constant 0 : index
    %c0_7 = arith.constant 0 : index
    %9 = vector.load %arg7[%c0_6, %c0_7] : memref<8x128xf32, #tpu.memory_space<vmem>>, vector<8x128xf32>
    %c0_8 = arith.constant 0 : index
    %c0_9 = arith.constant 0 : index
    %10 = vector.load %arg2[%c0_8, %c0_9] : memref<128x128xf32, #tpu.memory_space<vmem>>, vector<128x128xf32>
    %cst_10 = arith.constant dense<0.000000e+00> : vector<8x128xf32>
    %11 = tpu.matmul %9, %10, %cst_10 {dimension_numbers = #tpu.dot_dimension_numbers<[1], [0], [0], [1], [0, 0, 1, 1], [], []>} : vector<8x128xf32>, vector<128x128xf32>, vector<8x128xf32> -> vector<8x128xf32>
    %c0_11 = arith.constant 0 : index
    %c0_12 = arith.constant 0 : index
    %12 = vector.load %arg1[%c0_11, %c0_12] : memref<8x128xf32, #tpu.memory_space<vmem>>, vector<8x128xf32>
    %c0_13 = arith.constant 0 : index
    %c0_14 = arith.constant 0 : index
    %13 = vector.load %arg3[%c0_13, %c0_14] : memref<128x128xf32, #tpu.memory_space<vmem>>, vector<128x128xf32>
    %cst_15 = arith.constant dense<0.000000e+00> : vector<8x128xf32>
    %14 = tpu.matmul %12, %13, %cst_15 {dimension_numbers = #tpu.dot_dimension_numbers<[1], [0], [0], [1], [0, 0, 1, 1], [], []>} : vector<8x128xf32>, vector<128x128xf32>, vector<8x128xf32> -> vector<8x128xf32>
    %15 = arith.addf %11, %14 : vector<8x128xf32>
    %16 = math.tanh %15 : vector<8x128xf32>
    %17 = tpu.iota {dimensions = array<i32: 1>} : vector<8x128xi32>
    %c4_i32 = arith.constant 4 : i32
    %18 = vector.broadcast %c4_i32 : i32 to vector<8x128xi32>
    %19 = arith.cmpi eq, %17, %18 : vector<8x128xi32>
    %cst_16 = arith.constant 1.000000e+00 : f32
    %20 = vector.broadcast %cst_16 : f32 to vector<8x128xf32>
    %21 = arith.select %19, %20, %16 : vector<8x128xi1>, vector<8x128xf32>
    %c0_17 = arith.constant 0 : index
    %c0_18 = arith.constant 0 : index
    %22 = vector.load %arg4[%c0_17, %c0_18] : memref<128x128xf32, #tpu.memory_space<vmem>>, vector<128x128xf32>
    %cst_19 = arith.constant dense<0.000000e+00> : vector<8x128xf32>
    %23 = tpu.matmul %21, %22, %cst_19 {dimension_numbers = #tpu.dot_dimension_numbers<[1], [0], [0], [1], [0, 0, 1, 1], [], []>} : vector<8x128xf32>, vector<128x128xf32>, vector<8x128xf32> -> vector<8x128xf32>
    %c0_20 = arith.constant 0 : index
    %c0_21 = arith.constant 0 : index
    %24 = vector.load %arg6[%c0_20, %c0_21] : memref<8x128xf32, #tpu.memory_space<vmem>>, vector<8x128xf32>
    tpu.vector_store %arg6[%c0_20, %c0_21], %16 {strides = array<i32>} : memref<8x128xf32, #tpu.memory_space<vmem>>, vector<8x128xf32>,
    %c0_22 = arith.constant 0 : index
    %c0_23 = arith.constant 0 : index
    %25 = vector.load %arg5[%c0_22, %c0_23] : memref<8x128xf32, #tpu.memory_space<vmem>>, vector<8x128xf32>
    tpu.vector_store %arg5[%c0_22, %c0_23], %23 {strides = array<i32>} : memref<8x128xf32, #tpu.memory_space<vmem>>, vector<8x128xf32>,
    return
  }
}

</mosaic_0001>

<llo_original>
// kernel: forward.1
$region0: #{forward.1}
  #allocation0 [shape = 'u32[]', space=smem, size = 0x4, offset = 0x4, fixed_abs, tag = 'smem constant byte address 0x4 - core index']
  #allocation1 [shape = 'u32[72,128]{1,0:T(1,128)}', space=vmem, size = 0x9000, scoped, tag = 'internal scratch']
  #allocation2 [shape = 'f32[8,128]{1,0:T(8,128)}', space=vmem, size = 0x1000, scoped, tag = 'scratch operand']
  %s0 = inlined_call_operand.hbm [shape: f32[2,8], index: 0, kind: input, shape index: {}]
  %s1 = inlined_call_operand.hbm [shape: f32[8,128], index: 1, kind: input, shape index: {}]
  %s2 = inlined_call_operand.hbm [shape: f32[128,128], index: 2, kind: input, shape index: {}]
  %s3 = inlined_call_operand.hbm [shape: f32[128,128], index: 3, kind: input, shape index: {}]
  %s4 = inlined_call_operand.hbm [shape: f32[128,128], index: 4, kind: input, shape index: {}]
  %s5 = inlined_call_operand.vmem [shape: f32[8,128], index: 5, kind: output, shape index: {0}]
  %s6 = inlined_call_operand.hbm [shape: f32[8,128], index: 6, kind: output, shape index: {1}]
  %7 = xla_tuple %s5, %s6
  %s8 = sld [smem:[#allocation0]]
  $region58: #{forward.1} parent=0
    _
  %s10 = ssub.s32 1, %s8
  %s11 = scalar_select 0, %s10, %s8
  $region1: #{forward.1} parent=0
    #allocation3 [shape = 'u8[1024]{0}', space=vmem, size = 0x400, scoped, tag = 'input window, operand 0, single buffered']
    #allocation4 [shape = 's32[1]{0}', space=sflag, size = 0x4, scoped, tag = 'scoped memory for forward.1']
    #allocation5 [shape = 's32[1]{0}', space=sflag, size = 0x4, scoped, tag = 'scoped memory for forward.1']
    #allocation6 [shape = 'u8[4096]{0}', space=vmem, size = 0x1000, scoped, tag = 'input window, operand 1, single buffered']
    #allocation7 [shape = 's32[1]{0}', space=sflag, size = 0x4, scoped, tag = 'scoped memory for forward.1']
    #allocation8 [shape = 'u8[65536]{0}', space=vmem, size = 0x10000, scoped, tag = 'input window, operand 2, single buffered']
    #allocation9 [shape = 'u8[65536]{0}', space=vmem, size = 0x10000, scoped, tag = 'input window, operand 3, single buffered']
    #allocation10 [shape = 's32[1]{0}', space=sflag, size = 0x4, scoped, tag = 'scoped memory for forward.1']
    #allocation11 [shape = 'u8[65536]{0}', space=vmem, size = 0x10000, scoped, tag = 'input window, operand 4, single buffered']
    #allocation12 [shape = 'u8[4096]{0}', space=vmem, size = 0x1000, scoped, tag = 'output window, operand 1, single buffered']
    %12 = vsyncpa [#allocation4], 0
    %13 = vsyncpa [#allocation7], 0
    %14 = vsyncpa [#allocation10], 0
    %15 = vsyncpa [#allocation5], 0
    // Predicated region
    $region2: #{forward.1} parent=1 // pred_check
      _
    $region3: #{forward.1} parent=1 // pred_check_branch
      %17 = sbr.rel (0) target = $region5
    $region4: #{forward.1} parent=1 // pred_region
      %19 = vsyncadd [#allocation4], 0
      %s21 = sshll.u32 %s0, 4
      %s22 = int_to_ptr.hbm [resolvable:$true] %s21
      %s23 = sshll.u32 [#allocation3], 4
      %s24 = int_to_ptr.vmem [resolvable:$true] %s23
      %26 = dma.hbm_to_vmem [thread:$0]  %s22, 32, %s24, [#allocation4]
    $region5: #{forward.1} parent=1 // pred_fallthru
      _
    // Predicated region
    $region6: #{forward.1} parent=1 // pred_check
      _
    $region7: #{forward.1} parent=1 // pred_check_branch
      %28 = sbr.rel (0) target = $region9
    $region8: #{forward.1} parent=1 // pred_region
      %30 = vsyncadd [#allocation7], 0
      %s32 = sshll.u32 %s1, 4
      %s33 = int_to_ptr.hbm [resolvable:$true] %s32
      %s34 = sshll.u32 [#allocation6], 4
      %s35 = int_to_ptr.vmem [resolvable:$true] %s34
      %37 = dma.hbm_to_vmem [thread:$0]  %s33, 128, %s35, [#allocation7]
    $region9: #{forward.1} parent=1 // pred_fallthru
      _
    // Predicated region
    $region10: #{forward.1} parent=1 // pred_check
      _
    $region11: #{forward.1} parent=1 // pred_check_branch
      %39 = sbr.rel (0) target = $region13
    $region12: #{forward.1} parent=1 // pred_region
      %41 = vsyncadd [#allocation7], 0
      %s42 = sshll.u32 %s2, 4
      %s43 = int_to_ptr.hbm [resolvable:$true] %s42
      %s44 = sshll.u32 [#allocation8], 4
      %s45 = int_to_ptr.vmem [resolvable:$true] %s44
      %50 = dma.hbm_to_vmem [thread:$0]  %s43, 2048, %s45, [#allocation7], 128, 128, 8
    $region13: #{forward.1} parent=1 // pred_fallthru
      _
    // Predicated region
    $region14: #{forward.1} parent=1 // pred_check
      _
    $region15: #{forward.1} parent=1 // pred_check_branch
      %52 = sbr.rel (0) target = $region17
    $region16: #{forward.1} parent=1 // pred_region
      %54 = vsyncadd [#allocation10], 0
      %s55 = sshll.u32 %s3, 4
      %s56 = int_to_ptr.hbm [resolvable:$true] %s55
      %s57 = sshll.u32 [#allocation9], 4
      %s58 = int_to_ptr.vmem [resolvable:$true] %s57
      %63 = dma.hbm_to_vmem [thread:$0]  %s56, 2048, %s58, [#allocation10], 128, 128, 8
    $region17: #{forward.1} parent=1 // pred_fallthru
      _
    // Predicated region
    $region18: #{forward.1} parent=1 // pred_check
      _
    $region19: #{forward.1} parent=1 // pred_check_branch
      %65 = sbr.rel (0) target = $region21
    $region20: #{forward.1} parent=1 // pred_region
      %67 = vsyncadd [#allocation10], 0
      %s68 = sshll.u32 %s4, 4
      %s69 = int_to_ptr.hbm [resolvable:$true] %s68
      %s70 = sshll.u32 [#allocation11], 4
      %s71 = int_to_ptr.vmem [resolvable:$true] %s70
      %76 = dma.hbm_to_vmem [thread:$0]  %s69, 2048, %s71, [#allocation10], 128, 128, 8
    $region21: #{forward.1} parent=1 // pred_fallthru
      _
    // Predicated region
    $region22: #{forward.1} parent=1 // pred_check
      _
    $region23: #{forward.1} parent=1 // pred_check_branch
      %78 = sbr.rel (0) target = $region25
    $region24: #{forward.1} parent=1 // pred_region
      %80 = dma.done [#allocation4], 32
    $region25: #{forward.1} parent=1 // pred_fallthru
      _
    // Predicated region
    $region26: #{forward.1} parent=1 // pred_check
      _
    $region27: #{forward.1} parent=1 // pred_check_branch
      %82 = sbr.rel (0) target = $region29
    $region28: #{forward.1} parent=1 // pred_region
      %84 = dma.done [#allocation7], 128
    $region29: #{forward.1} parent=1 // pred_fallthru
      _
    // Predicated region
    $region30: #{forward.1} parent=1 // pred_check
      _
    $region31: #{forward.1} parent=1 // pred_check_branch
      %86 = sbr.rel (0) target = $region33
    $region32: #{forward.1} parent=1 // pred_region
      %88 = dma.done [#allocation7], 2048
    $region33: #{forward.1} parent=1 // pred_fallthru
      _
    // Predicated region
    $region34: #{forward.1} parent=1 // pred_check
      _
    $region35: #{forward.1} parent=1 // pred_check_branch
      %90 = sbr.rel (0) target = $region37
    $region36: #{forward.1} parent=1 // pred_region
      %92 = dma.done [#allocation10], 2048
    $region37: #{forward.1} parent=1 // pred_fallthru
      _
    // Predicated region
    $region38: #{forward.1} parent=1 // pred_check
      _
    $region39: #{forward.1} parent=1 // pred_check_branch
      %94 = sbr.rel (0) target = $region41
    $region40: #{forward.1} parent=1 // pred_region
      %96 = dma.done [#allocation10], 2048
    $region41: #{forward.1} parent=1 // pred_fallthru
      _
    %v97 = vlaneseq
    %v98 = vand.u32 %v97, 127
    %vm99 = vcmp.eq.s32.totalorder %v98, 8
    %v100 = vsel %vm99, 1.0, 0.0
    %101 = vst [vmem:[#allocation2] sm:$0xff] %v100
    %v102 = vld [vmem:[#allocation3] sm:$0x3]
    %vm103 = vcmask 58368
    %104 = vst.msk [vmem:[#allocation2] sm:$0x3] %vm103, %v102
    %v105 = vld [vmem:[#allocation2] sm:$0xff]
    %v106 = vld [vmem:[#allocation8] sm:$0xff]
    %v107 = vld [vmem:[#allocation8 + $0x8] sm:$0xff]
    %v108 = vld [vmem:[#allocation8 + $0x10] sm:$0xff]
    %v109 = vld [vmem:[#allocation8 + $0x18] sm:$0xff]
    %v110 = vld [vmem:[#allocation8 + $0x20] sm:$0xff]
    %v111 = vld [vmem:[#allocation8 + $0x28] sm:$0xff]
    %v112 = vld [vmem:[#allocation8 + $0x30] sm:$0xff]
    %v113 = vld [vmem:[#allocation8 + $0x38] sm:$0xff]
    %v114 = vld [vmem:[#allocation8 + $0x40] sm:$0xff]
    %v115 = vld [vmem:[#allocation8 + $0x48] sm:$0xff]
    %v116 = vld [vmem:[#allocation8 + $0x50] sm:$0xff]
    %v117 = vld [vmem:[#allocation8 + $0x58] sm:$0xff]
    %v118 = vld [vmem:[#allocation8 + $0x60] sm:$0xff]
    %v119 = vld [vmem:[#allocation8 + $0x68] sm:$0xff]
    %v120 = vld [vmem:[#allocation8 + $0x70] sm:$0xff]
    %v121 = vld [vmem:[#allocation8 + $0x78] sm:$0xff]
    %v122 = vld [vmem:[#allocation6] sm:$0xff]
    %v123 = vld [vmem:[#allocation9] sm:$0xff]
    %v124 = vld [vmem:[#allocation9 + $0x8] sm:$0xff]
    %v125 = vld [vmem:[#allocation9 + $0x10] sm:$0xff]
    %v126 = vld [vmem:[#allocation9 + $0x18] sm:$0xff]
    %v127 = vld [vmem:[#allocation9 + $0x20] sm:$0xff]
    %v128 = vld [vmem:[#allocation9 + $0x28] sm:$0xff]
    %v129 = vld [vmem:[#allocation9 + $0x30] sm:$0xff]
    %v130 = vld [vmem:[#allocation9 + $0x38] sm:$0xff]
    %v131 = vld [vmem:[#allocation9 + $0x40] sm:$0xff]
    %v132 = vld [vmem:[#allocation9 + $0x48] sm:$0xff]
    %v133 = vld [vmem:[#allocation9 + $0x50] sm:$0xff]
    %v134 = vld [vmem:[#allocation9 + $0x58] sm:$0xff]
    %v135 = vld [vmem:[#allocation9 + $0x60] sm:$0xff]
    %v136 = vld [vmem:[#allocation9 + $0x68] sm:$0xff]
    %v137 = vld [vmem:[#allocation9 + $0x70] sm:$0xff]
    %v138 = vld [vmem:[#allocation9 + $0x78] sm:$0xff]
    %139 = vmatpush.msra.mxu0 %v138
    %140 = vmatpush.msra.mxu0 %v137
    %141 = vmatpush.msra.mxu0 %v136
    %142 = vmatpush.msra.mxu0 %v135
    %143 = vmatpush.msra.mxu0 %v134
    %144 = vmatpush.msra.mxu0 %v133
    %145 = vmatpush.msra.mxu0 %v132
    %146 = vmatpush.msra.mxu0 %v131
    %147 = vmatpush.msra.mxu0 %v130
    %148 = vmatpush.msra.mxu0 %v129
    %149 = vmatpush.msra.mxu0 %v128
    %150 = vmatpush.msra.mxu0 %v127
    %151 = vmatpush.msra.mxu0 %v126
    %152 = vmatpush.msra.mxu0 %v125
    %153 = vmatpush.msra.mxu0 %v124
    %154 = vmatpush.msra.mxu0 %v123
    %155 = vmatmul.f32.gmra.mxu0 %v122
    %v156 = vpop.f32.mrf.mxu0
    %v157 = vadd.f32 0.0, %v156
    %158 = vdwg.mxu0
    %159 = vmatpush.msra.mxu0 %v121
    %160 = vmatpush.msra.mxu0 %v120
    %161 = vmatpush.msra.mxu0 %v119
    %162 = vmatpush.msra.mxu0 %v118
    %163 = vmatpush.msra.mxu0 %v117
    %164 = vmatpush.msra.mxu0 %v116
    %165 = vmatpush.msra.mxu0 %v115
    %166 = vmatpush.msra.mxu0 %v114
    %167 = vmatpush.msra.mxu0 %v113
    %168 = vmatpush.msra.mxu0 %v112
    %169 = vmatpush.msra.mxu0 %v111
    %170 = vmatpush.msra.mxu0 %v110
    %171 = vmatpush.msra.mxu0 %v109
    %172 = vmatpush.msra.mxu0 %v108
    %173 = vmatpush.msra.mxu0 %v107
    %174 = vmatpush.msra.mxu0 %v106
    %175 = vmatmul.f32.gmra.mxu0 %v105
    %v176 = vpop.f32.mrf.mxu0
    %v177 = vadd.f32 %v157, %v176
    %178 = vdwg.mxu0
    %v179 = vtanh.pop %v177
    %vm180 = vcmp.eq.s32.totalorder %v98, 4
    %v181 = vsel %vm180, 1.0, %v179
    %v182 = vld [vmem:[#allocation11] sm:$0xff]
    %v183 = vld [vmem:[#allocation11 + $0x8] sm:$0xff]
    %v184 = vld [vmem:[#allocation11 + $0x10] sm:$0xff]
    %v185 = vld [vmem:[#allocation11 + $0x18] sm:$0xff]
    %v186 = vld [vmem:[#allocation11 + $0x20] sm:$0xff]
    %v187 = vld [vmem:[#allocation11 + $0x28] sm:$0xff]
    %v188 = vld [vmem:[#allocation11 + $0x30] sm:$0xff]
    %v189 = vld [vmem:[#allocation11 + $0x38] sm:$0xff]
    %v190 = vld [vmem:[#allocation11 + $0x40] sm:$0xff]
    %v191 = vld [vmem:[#allocation11 + $0x48] sm:$0xff]
    %v192 = vld [vmem:[#allocation11 + $0x50] sm:$0xff]
    %v193 = vld [vmem:[#allocation11 + $0x58] sm:$0xff]
    %v194 = vld [vmem:[#allocation11 + $0x60] sm:$0xff]
    %v195 = vld [vmem:[#allocation11 + $0x68] sm:$0xff]
    %v196 = vld [vmem:[#allocation11 + $0x70] sm:$0xff]
    %v197 = vld [vmem:[#allocation11 + $0x78] sm:$0xff]
    %198 = vmatpush.msra.mxu0 %v197
    %199 = vmatpush.msra.mxu0 %v196
    %200 = vmatpush.msra.mxu0 %v195
    %201 = vmatpush.msra.mxu0 %v194
    %202 = vmatpush.msra.mxu0 %v193
    %203 = vmatpush.msra.mxu0 %v192
    %204 = vmatpush.msra.mxu0 %v191
    %205 = vmatpush.msra.mxu0 %v190
    %206 = vmatpush.msra.mxu0 %v189
    %207 = vmatpush.msra.mxu0 %v188
    %208 = vmatpush.msra.mxu0 %v187
    %209 = vmatpush.msra.mxu0 %v186
    %210 = vmatpush.msra.mxu0 %v185
    %211 = vmatpush.msra.mxu0 %v184
    %212 = vmatpush.msra.mxu0 %v183
    %213 = vmatpush.msra.mxu0 %v182
    %214 = vmatmul.f32.gmra.mxu0 %v181
    %v215 = vpop.f32.mrf.mxu0
    %v216 = vadd.f32 0.0, %v215
    %217 = vdwg.mxu0
    %218 = vst [vmem:[#allocation12] sm:$0xff] %v179
    %219 = vst [vmem:[%s5] sm:$0xff] %v216
    // Predicated region
    $region42: #{forward.1} parent=1 // pred_check
      _
    $region43: #{forward.1} parent=1 // pred_check_branch
      %221 = sbr.rel (0) target = $region45
    $region44: #{forward.1} parent=1 // pred_region
      _
    $region45: #{forward.1} parent=1 // pred_fallthru
      _
    // Predicated region
    $region46: #{forward.1} parent=1 // pred_check
      _
    $region47: #{forward.1} parent=1 // pred_check_branch
      %223 = sbr.rel (0) target = $region49
    $region48: #{forward.1} parent=1 // pred_region
      %225 = vsyncadd [#allocation5], 0
      %s227 = sshll.u32 [#allocation12], 4
      %s228 = int_to_ptr.vmem [resolvable:$true] %s227
      %s229 = sshll.u32 %s6, 4
      %s230 = int_to_ptr.hbm [resolvable:$true] %s229
      %232 = dma.vmem_to_hbm [thread:$0]  %s228, 128, %s230, [#allocation5]
    $region49: #{forward.1} parent=1 // pred_fallthru
      _
    // Predicated region
    $region50: #{forward.1} parent=1 // pred_check
      _
    $region51: #{forward.1} parent=1 // pred_check_branch
      %234 = sbr.rel (0) target = $region53
    $region52: #{forward.1} parent=1 // pred_region
      _
    $region53: #{forward.1} parent=1 // pred_fallthru
      _
    // Predicated region
    $region54: #{forward.1} parent=1 // pred_check
      _
    $region55: #{forward.1} parent=1 // pred_check_branch
      %236 = sbr.rel (0) target = $region57
    $region56: #{forward.1} parent=1 // pred_region
      %238 = dma.done [#allocation5], 128
    $region57: #{forward.1} parent=1 // pred_fallthru
      _
    %239 = vsyncpa [#allocation4], 1
    %240 = vsyncpa [#allocation7], 1
    %241 = vsyncpa [#allocation10], 1
    %242 = vsyncpa [#allocation5], 1

</llo_original>
